<compile_context>
chip_gen: v6e
topology: v6e:2x2x1
jax: 0.10.0
libtpu: 0.0.40
codegen_flags: <defaults>
</compile_context>

<pallas_src>
import jax
import jax.numpy as jnp
from jax.experimental import pallas as pl
from jax.experimental.pallas import tpu as pltpu

LANES = 128  # vreg lane width; batch maps onto this axis


def _generator_kernel(w1_ref, b1_ref, w2_ref, b2_ref, x_ref, o_ref):
    # w1_ref: (3,)  b1_ref: (3,)  w2_ref: (12,)  b2_ref: (4,)   [SMEM scalars]
    # x_ref : (TILE_R, 128)       lane-dense batch tile          [VMEM]
    # o_ref : (4, TILE_R, 128)    one lane-dense plane per output feature
    x = x_ref[...]  # f32

    # Layer 1: Linear(1, 3) + Sigmoid  ->  pure VPU broadcast-FMA + EUP sigmoid
    h0 = jax.nn.sigmoid(x * w1_ref[0] + b1_ref[0])
    h1 = jax.nn.sigmoid(x * w1_ref[1] + b1_ref[1])
    h2 = jax.nn.sigmoid(x * w1_ref[2] + b1_ref[2])

    # Layer 2: Linear(3, 4) + Sigmoid  ->  3 unrolled FMAs per output feature
    for k in range(4):  # static unroll, w2 is row-major (out=4, in=3)
        y = (h0 * w2_ref[3 * k + 0]
             + h1 * w2_ref[3 * k + 1]
             + h2 * w2_ref[3 * k + 2]
             + b2_ref[k])
        o_ref[k] = jax.nn.sigmoid(y).astype(o_ref.dtype)


def generator_forward(x, w1, b1, w2, b2, *, tile_r=512, out_dtype=jnp.float32):
    """Generator forward pass.

    x : (B, 1) f32.  Weights in PyTorch convention: w1 (3,1), b1 (3,),
    w2 (4,3), b2 (4,).  Returns (B, 4) in `out_dtype` (f32 by default;
    bf16 halves HBM writeback on v6e/v7x).
    """
    B = int(x.shape[0])

    # ---- lane-dense layout: batch -> (rows, 128) -----------------------
    rows = -(-B // LANES)                       # ceil(B / 128)
    rows_pad = -(-rows // 8) * 8                # sublane multiple of 8
    tile_r = max(8, min(tile_r, rows_pad))
    tile_r = (tile_r // 8) * 8                  # keep (8,128)-aligned blocks
    rows_pad = -(-rows_pad // tile_r) * tile_r  # pad rows to a tile multiple
    n_tiles = rows_pad // tile_r

    x_flat = x.reshape(-1).astype(jnp.float32)
    x2d = jnp.pad(x_flat, (0, rows_pad * LANES - B)).reshape(rows_pad, LANES)

    # ---- 22 weight/bias scalars live in SMEM, resident across the grid --
    w1_s = w1.reshape(3).astype(jnp.float32)
    b1_s = b1.reshape(3).astype(jnp.float32)
    w2_s = w2.reshape(12).astype(jnp.float32)   # row-major (out=4, in=3)
    b2_s = b2.reshape(4).astype(jnp.float32)

    smem_spec = pl.BlockSpec(memory_space=pltpu.MemorySpace.SMEM)

    out = pl.pallas_call(
        _generator_kernel,
        out_shape=jax.ShapeDtypeStruct((4, rows_pad, LANES), out_dtype),
        grid=(n_tiles,),
        in_specs=[
            smem_spec,  # w1
            smem_spec,  # b1
            smem_spec,  # w2
            smem_spec,  # b2
            pl.BlockSpec((tile_r, LANES), lambda i: (i, 0)),      # x tile
        ],
        out_specs=pl.BlockSpec((4, tile_r, LANES), lambda i: (0, i, 0)),
        compiler_params=pltpu.CompilerParams(
            dimension_semantics=("parallel",)),
    )(w1_s, b1_s, w2_s, b2_s, x2d)

    # (4, rows_pad*128) -> strip padding -> (B, 4)
    return out.reshape(4, rows_pad * LANES)[:, :B].T


def init_params(key):
    """Matches PyTorch nn.Linear default init: U(-1/sqrt(fan_in), 1/sqrt(fan_in))."""
    k1, k2, k3, k4 = jax.random.split(key, 4)
    bound1 = 1.0                     # fan_in = 1
    bound2 = 1.0 / jnp.sqrt(3.0)     # fan_in = 3
    w1 = jax.random.uniform(k1, (3, 1), jnp.float32, -bound1, bound1)
    b1 = jax.random.uniform(k2, (3,), jnp.float32, -bound1, bound1)
    w2 = jax.random.uniform(k3, (4, 3), jnp.float32, -bound2, bound2)
    b2 = jax.random.uniform(k4, (4,), jnp.float32, -bound2, bound2)
    return w1, b1, w2, b2


def reference_forward(x, w1, b1, w2, b2):
    h = jax.nn.sigmoid(x @ w1.T + b1)
    return jax.nn.sigmoid(h @ w2.T + b2)


# TODO(synk): the PyTorch module's `train()` (SGD step / loss via discriminator)
# is training-loop logic, not part of the forward pass, and is not implemented.

if __name__ == "__main__":
    key = jax.random.PRNGKey(0)
    kx, kp = jax.random.split(key)
    w1, b1, w2, b2 = init_params(kp)

    # Primary small check (single tile, B < 128).
    B = 8
    x = jax.random.uniform(kx, (B, 1), jnp.float32)
    out = jax.block_until_ready(generator_forward(x, w1, b1, w2, b2))
    ref = reference_forward(x, w1, b1, w2, b2)
    assert out.shape == (B, 4)
    assert jnp.allclose(out, ref, atol=1e-5, rtol=1e-5)

    # Exercise the batch grid + padding path (grid > 1, B not multiple of 128).
    B2 = 2085
    x2 = jax.random.uniform(kx, (B2, 1), jnp.float32)
    out2 = jax.block_until_ready(
        generator_forward(x2, w1, b1, w2, b2, tile_r=8))
    ref2 = reference_forward(x2, w1, b1, w2, b2)
    assert out2.shape == (B2, 4)
    assert jnp.allclose(out2, ref2, atol=1e-5, rtol=1e-5)

    print("KERNEL_OK")
</pallas_src>

<mosaic_0001>
module attributes {stable_mosaic.version = 11 : i64} {
  func.func @_generator_kernel(%arg0: i32, %arg1: memref<3xf32, #tpu.memory_space<smem>>, %arg2: memref<3xf32, #tpu.memory_space<smem>>, %arg3: memref<12xf32, #tpu.memory_space<smem>>, %arg4: memref<4xf32, #tpu.memory_space<smem>>, %arg5: memref<8x128xf32, #tpu.memory_space<vmem>>, %arg6: memref<4x8x128xf32, #tpu.memory_space<vmem>>) attributes {dimension_semantics = [#tpu.dimension_semantics<parallel>], iteration_bounds = array<i64: 1>, scalar_prefetch = 0 : i64, scratch_operands = 0 : i64, tpu.core_type = #tpu.core_type<tc>, window_params = [{transform_indices = @transform_0, window_bounds = array<i64: 3>}, {transform_indices = @transform_1, window_bounds = array<i64: 3>}, {transform_indices = @transform_2, window_bounds = array<i64: 12>}, {transform_indices = @transform_3, window_bounds = array<i64: 4>}, {transform_indices = @transform_4, window_bounds = array<i64: 8, 128>}, {transform_indices = @transform_5, window_bounds = array<i64: 4, 8, 128>}]} {
    %c0 = arith.constant 0 : index
    %c0_0 = arith.constant 0 : index
    %0 = vector.load %arg5[%c0, %c0_0] : memref<8x128xf32, #tpu.memory_space<vmem>>, vector<8x128xf32>
    %c0_1 = arith.constant 0 : index
    %1 = memref.load %arg1[%c0_1] : memref<3xf32, #tpu.memory_space<smem>>
    %2 = vector.broadcast %1 : f32 to vector<8x128xf32>
    %3 = arith.mulf %0, %2 : vector<8x128xf32>
    %c0_2 = arith.constant 0 : index
    %4 = memref.load %arg2[%c0_2] : memref<3xf32, #tpu.memory_space<smem>>
    %5 = vector.broadcast %4 : f32 to vector<8x128xf32>
    %6 = arith.addf %3, %5 : vector<8x128xf32>
    %7 = arith.negf %6 : vector<8x128xf32>
    %8 = math.exp %7 : vector<8x128xf32>
    %cst = arith.constant 1.000000e+00 : f32
    %9 = vector.broadcast %cst : f32 to vector<8x128xf32>
    %10 = arith.addf %9, %8 : vector<8x128xf32>
    %11 = arith.divf %9, %10 : vector<8x128xf32>
    %c1 = arith.constant 1 : index
    %12 = memref.load %arg1[%c1] : memref<3xf32, #tpu.memory_space<smem>>
    %13 = vector.broadcast %12 : f32 to vector<8x128xf32>
    %14 = arith.mulf %0, %13 : vector<8x128xf32>
    %c1_3 = arith.constant 1 : index
    %15 = memref.load %arg2[%c1_3] : memref<3xf32, #tpu.memory_space<smem>>
    %16 = vector.broadcast %15 : f32 to vector<8x128xf32>
    %17 = arith.addf %14, %16 : vector<8x128xf32>
    %18 = arith.negf %17 : vector<8x128xf32>
    %19 = math.exp %18 : vector<8x128xf32>
    %cst_4 = arith.constant 1.000000e+00 : f32
    %20 = vector.broadcast %cst_4 : f32 to vector<8x128xf32>
    %21 = arith.addf %20, %19 : vector<8x128xf32>
    %22 = arith.divf %20, %21 : vector<8x128xf32>
    %c2 = arith.constant 2 : index
    %23 = memref.load %arg1[%c2] : memref<3xf32, #tpu.memory_space<smem>>
    %24 = vector.broadcast %23 : f32 to vector<8x128xf32>
    %25 = arith.mulf %0, %24 : vector<8x128xf32>
    %c2_5 = arith.constant 2 : index
    %26 = memref.load %arg2[%c2_5] : memref<3xf32, #tpu.memory_space<smem>>
    %27 = vector.broadcast %26 : f32 to vector<8x128xf32>
    %28 = arith.addf %25, %27 : vector<8x128xf32>
    %29 = arith.negf %28 : vector<8x128xf32>
    %30 = math.exp %29 : vector<8x128xf32>
    %cst_6 = arith.constant 1.000000e+00 : f32
    %31 = vector.broadcast %cst_6 : f32 to vector<8x128xf32>
    %32 = arith.addf %31, %30 : vector<8x128xf32>
    %33 = arith.divf %31, %32 : vector<8x128xf32>
    %c0_7 = arith.constant 0 : index
    %34 = memref.load %arg3[%c0_7] : memref<12xf32, #tpu.memory_space<smem>>
    %35 = vector.broadcast %34 : f32 to vector<8x128xf32>
    %36 = arith.mulf %11, %35 : vector<8x128xf32>
    %c1_8 = arith.constant 1 : index
    %37 = memref.load %arg3[%c1_8] : memref<12xf32, #tpu.memory_space<smem>>
    %38 = vector.broadcast %37 : f32 to vector<8x128xf32>
    %39 = arith.mulf %22, %38 : vector<8x128xf32>
    %40 = arith.addf %36, %39 : vector<8x128xf32>
    %c2_9 = arith.constant 2 : index
    %41 = memref.load %arg3[%c2_9] : memref<12xf32, #tpu.memory_space<smem>>
    %42 = vector.broadcast %41 : f32 to vector<8x128xf32>
    %43 = arith.mulf %33, %42 : vector<8x128xf32>
    %44 = arith.addf %40, %43 : vector<8x128xf32>
    %c0_10 = arith.constant 0 : index
    %45 = memref.load %arg4[%c0_10] : memref<4xf32, #tpu.memory_space<smem>>
    %46 = vector.broadcast %45 : f32 to vector<8x128xf32>
    %47 = arith.addf %44, %46 : vector<8x128xf32>
    %48 = arith.negf %47 : vector<8x128xf32>
    %49 = math.exp %48 : vector<8x128xf32>
    %cst_11 = arith.constant 1.000000e+00 : f32
    %50 = vector.broadcast %cst_11 : f32 to vector<8x128xf32>
    %51 = arith.addf %50, %49 : vector<8x128xf32>
    %52 = arith.divf %50, %51 : vector<8x128xf32>
    %c0_12 = arith.constant 0 : index
    %c0_13 = arith.constant 0 : index
    %c0_14 = arith.constant 0 : index
    %53 = vector.load %arg6[%c0_12, %c0_13, %c0_14] : memref<4x8x128xf32, #tpu.memory_space<vmem>>, vector<1x8x128xf32>
    %54 = vector.shape_cast %53 : vector<1x8x128xf32> to vector<8x128xf32>
    %55 = vector.shape_cast %52 : vector<8x128xf32> to vector<1x8x128xf32>
    tpu.vector_store %arg6[%c0_12, %c0_13, %c0_14], %55 {strides = array<i32>} : memref<4x8x128xf32, #tpu.memory_space<vmem>>, vector<1x8x128xf32>,
    %c3 = arith.constant 3 : index
    %56 = memref.load %arg3[%c3] : memref<12xf32, #tpu.memory_space<smem>>
    %57 = vector.broadcast %56 : f32 to vector<8x128xf32>
    %58 = arith.mulf %11, %57 : vector<8x128xf32>
    %c4 = arith.constant 4 : index
    %59 = memref.load %arg3[%c4] : memref<12xf32, #tpu.memory_space<smem>>
    %60 = vector.broadcast %59 : f32 to vector<8x128xf32>
    %61 = arith.mulf %22, %60 : vector<8x128xf32>
    %62 = arith.addf %58, %61 : vector<8x128xf32>
    %c5 = arith.constant 5 : index
    %63 = memref.load %arg3[%c5] : memref<12xf32, #tpu.memory_space<smem>>
    %64 = vector.broadcast %63 : f32 to vector<8x128xf32>
    %65 = arith.mulf %33, %64 : vector<8x128xf32>
    %66 = arith.addf %62, %65 : vector<8x128xf32>
    %c1_15 = arith.constant 1 : index
    %67 = memref.load %arg4[%c1_15] : memref<4xf32, #tpu.memory_space<smem>>
    %68 = vector.broadcast %67 : f32 to vector<8x128xf32>
    %69 = arith.addf %66, %68 : vector<8x128xf32>
    %70 = arith.negf %69 : vector<8x128xf32>
    %71 = math.exp %70 : vector<8x128xf32>
    %cst_16 = arith.constant 1.000000e+00 : f32
    %72 = vector.broadcast %cst_16 : f32 to vector<8x128xf32>
    %73 = arith.addf %72, %71 : vector<8x128xf32>
    %74 = arith.divf %72, %73 : vector<8x128xf32>
    %c1_17 = arith.constant 1 : index
    %c0_18 = arith.constant 0 : index
    %c0_19 = arith.constant 0 : index
    %75 = vector.load %arg6[%c1_17, %c0_18, %c0_19] : memref<4x8x128xf32, #tpu.memory_space<vmem>>, vector<1x8x128xf32>
    %76 = vector.shape_cast %75 : vector<1x8x128xf32> to vector<8x128xf32>
    %77 = vector.shape_cast %74 : vector<8x128xf32> to vector<1x8x128xf32>
    tpu.vector_store %arg6[%c1_17, %c0_18, %c0_19], %77 {strides = array<i32>} : memref<4x8x128xf32, #tpu.memory_space<vmem>>, vector<1x8x128xf32>,
    %c6 = arith.constant 6 : index
    %78 = memref.load %arg3[%c6] : memref<12xf32, #tpu.memory_space<smem>>
    %79 = vector.broadcast %78 : f32 to vector<8x128xf32>
    %80 = arith.mulf %11, %79 : vector<8x128xf32>
    %c7 = arith.constant 7 : index
    %81 = memref.load %arg3[%c7] : memref<12xf32, #tpu.memory_space<smem>>
    %82 = vector.broadcast %81 : f32 to vector<8x128xf32>
    %83 = arith.mulf %22, %82 : vector<8x128xf32>
    %84 = arith.addf %80, %83 : vector<8x128xf32>
    %c8 = arith.constant 8 : index
    %85 = memref.load %arg3[%c8] : memref<12xf32, #tpu.memory_space<smem>>
    %86 = vector.broadcast %85 : f32 to vector<8x128xf32>
    %87 = arith.mulf %33, %86 : vector<8x128xf32>
    %88 = arith.addf %84, %87 : vector<8x128xf32>
    %c2_20 = arith.constant 2 : index
    %89 = memref.load %arg4[%c2_20] : memref<4xf32, #tpu.memory_space<smem>>
    %90 = vector.broadcast %89 : f32 to vector<8x128xf32>
    %91 = arith.addf %88, %90 : vector<8x128xf32>
    %92 = arith.negf %91 : vector<8x128xf32>
    %93 = math.exp %92 : vector<8x128xf32>
    %cst_21 = arith.constant 1.000000e+00 : f32
    %94 = vector.broadcast %cst_21 : f32 to vector<8x128xf32>
    %95 = arith.addf %94, %93 : vector<8x128xf32>
    %96 = arith.divf %94, %95 : vector<8x128xf32>
    %c2_22 = arith.constant 2 : index
    %c0_23 = arith.constant 0 : index
    %c0_24 = arith.constant 0 : index
    %97 = vector.load %arg6[%c2_22, %c0_23, %c0_24] : memref<4x8x128xf32, #tpu.memory_space<vmem>>, vector<1x8x128xf32>
    %98 = vector.shape_cast %97 : vector<1x8x128xf32> to vector<8x128xf32>
    %99 = vector.shape_cast %96 : vector<8x128xf32> to vector<1x8x128xf32>
    tpu.vector_store %arg6[%c2_22, %c0_23, %c0_24], %99 {strides = array<i32>} : memref<4x8x128xf32, #tpu.memory_space<vmem>>, vector<1x8x128xf32>,
    %c9 = arith.constant 9 : index
    %100 = memref.load %arg3[%c9] : memref<12xf32, #tpu.memory_space<smem>>
    %101 = vector.broadcast %100 : f32 to vector<8x128xf32>
    %102 = arith.mulf %11, %101 : vector<8x128xf32>
    %c10 = arith.constant 10 : index
    %103 = memref.load %arg3[%c10] : memref<12xf32, #tpu.memory_space<smem>>
    %104 = vector.broadcast %103 : f32 to vector<8x128xf32>
    %105 = arith.mulf %22, %104 : vector<8x128xf32>
    %106 = arith.addf %102, %105 : vector<8x128xf32>
    %c11 = arith.constant 11 : index
    %107 = memref.load %arg3[%c11] : memref<12xf32, #tpu.memory_space<smem>>
    %108 = vector.broadcast %107 : f32 to vector<8x128xf32>
    %109 = arith.mulf %33, %108 : vector<8x128xf32>
    %110 = arith.addf %106, %109 : vector<8x128xf32>
    %c3_25 = arith.constant 3 : index
    %111 = memref.load %arg4[%c3_25] : memref<4xf32, #tpu.memory_space<smem>>
    %112 = vector.broadcast %111 : f32 to vector<8x128xf32>
    %113 = arith.addf %110, %112 : vector<8x128xf32>
    %114 = arith.negf %113 : vector<8x128xf32>
    %115 = math.exp %114 : vector<8x128xf32>
    %cst_26 = arith.constant 1.000000e+00 : f32
    %116 = vector.broadcast %cst_26 : f32 to vector<8x128xf32>
    %117 = arith.addf %116, %115 : vector<8x128xf32>
    %118 = arith.divf %116, %117 : vector<8x128xf32>
    %c3_27 = arith.constant 3 : index
    %c0_28 = arith.constant 0 : index
    %c0_29 = arith.constant 0 : index
    %119 = vector.load %arg6[%c3_27, %c0_28, %c0_29] : memref<4x8x128xf32, #tpu.memory_space<vmem>>, vector<1x8x128xf32>
    %120 = vector.shape_cast %119 : vector<1x8x128xf32> to vector<8x128xf32>
    %121 = vector.shape_cast %118 : vector<8x128xf32> to vector<1x8x128xf32>
    tpu.vector_store %arg6[%c3_27, %c0_28, %c0_29], %121 {strides = array<i32>} : memref<4x8x128xf32, #tpu.memory_space<vmem>>, vector<1x8x128xf32>,
    return
  }
  func.func @transform_0(%arg0: i32) -> i32 {
    %c0_i32 = arith.constant 0 : i32
    %c0_i32_0 = arith.constant 0 : i32
    return %c0_i32 : i32
  }
  func.func @transform_1(%arg0: i32) -> i32 {
    %c0_i32 = arith.constant 0 : i32
    %c0_i32_0 = arith.constant 0 : i32
    return %c0_i32 : i32
  }
  func.func @transform_2(%arg0: i32) -> i32 {
    %c0_i32 = arith.constant 0 : i32
    %c0_i32_0 = arith.constant 0 : i32
    return %c0_i32 : i32
  }
  func.func @transform_3(%arg0: i32) -> i32 {
    %c0_i32 = arith.constant 0 : i32
    %c0_i32_0 = arith.constant 0 : i32
    return %c0_i32 : i32
  }
  func.func @transform_4(%arg0: i32) -> (i32, i32) {
    %c0_i32 = arith.constant 0 : i32
    %c0_i32_0 = arith.constant 0 : i32
    return %arg0, %c0_i32 : i32, i32
  }
  func.func @transform_5(%arg0: i32) -> (i32, i32, i32) {
    %c0_i32 = arith.constant 0 : i32
    %c0_i32_0 = arith.constant 0 : i32
    %c0_i32_1 = arith.constant 0 : i32
    return %c0_i32, %arg0, %c0_i32_0 : i32, i32, i32
  }
}

</mosaic_0001>

<llo_original>
// kernel: tpu_custom_call.1
$region0: #{tpu_custom_call.1}
  #allocation0 [shape = 'u32[]', space=smem, size = 0x4, offset = 0x4, fixed_abs, tag = 'smem constant byte address 0x4 - core index']
  #allocation1 [shape = 'u32[144,128]{1,0:T(1,128)}', space=vmem, size = 0x12000, scoped, tag = 'internal scratch']
  %s0 = inlined_call_operand.hbm [shape: f32[3], index: 0, kind: input, shape index: {}]
  %s1 = inlined_call_operand.vmem [shape: f32[3], index: 1, kind: input, shape index: {}]
  %s2 = inlined_call_operand.vmem [shape: f32[12], index: 2, kind: input, shape index: {}]
  %s3 = inlined_call_operand.vmem [shape: f32[4], index: 3, kind: input, shape index: {}]
  %s4 = inlined_call_operand.hbm [shape: f32[8,128], index: 4, kind: input, shape index: {}]
  %s5 = inlined_call_operand.hbm [shape: f32[4,8,128], index: 5, kind: output, shape index: {}]
  %s6 = sld [smem:[#allocation0]]
  $region50: #{tpu_custom_call.1} parent=0
    _
  %s8 = ssub.s32 1, %s6
  %s9 = scalar_select 0, %s8, %s6
  $region1: #{tpu_custom_call.1} parent=0
    #allocation2 [shape = 'u8[512]{0}', space=smem, size = 0x200, scoped, tag = 'input window, operand 0, single buffered']
    #allocation3 [shape = 's32[1]{0}', space=sflag, size = 0x4, scoped, tag = 'scoped memory for tpu_custom_call.1']
    #allocation4 [shape = 's32[1]{0}', space=sflag, size = 0x4, scoped, tag = 'scoped memory for tpu_custom_call.1']
    #allocation5 [shape = 's32[1]{0}', space=sflag, size = 0x4, scoped, tag = 'scoped memory for tpu_custom_call.1']
    #allocation6 [shape = 's32[1]{0}', space=sflag, size = 0x4, scoped, tag = 'scoped memory for tpu_custom_call.1']
    #allocation7 [shape = 'u8[512]{0}', space=smem, size = 0x200, scoped, tag = 'input window, operand 1, single buffered']
    #allocation8 [shape = 'u8[512]{0}', space=smem, size = 0x200, scoped, tag = 'input window, operand 2, single buffered']
    #allocation9 [shape = 's32[1]{0}', space=sflag, size = 0x4, scoped, tag = 'scoped memory for tpu_custom_call.1']
    #allocation10 [shape = 'u8[512]{0}', space=smem, size = 0x200, scoped, tag = 'input window, operand 3, single buffered']
    #allocation11 [shape = 'u8[4096]{0}', space=vmem, size = 0x1000, scoped, tag = 'input window, operand 4, single buffered']
    #allocation12 [shape = 'u8[16384]{0}', space=vmem, size = 0x4000, scoped, tag = 'output window, operand 0, single buffered']
    %10 = vsyncpa [#allocation5], 0
    %11 = vsyncpa [#allocation6], 0
    %12 = vsyncpa [#allocation9], 0
    %13 = vsyncpa [#allocation3], 0
    %14 = vsyncpa [#allocation4], 0
    // Predicated region
    $region2: #{tpu_custom_call.1} parent=1 // pred_check
      _
    $region3: #{tpu_custom_call.1} parent=1 // pred_check_branch
      %16 = sbr.rel (0) target = $region5
    $region4: #{tpu_custom_call.1} parent=1 // pred_region
      %s18 = ssub.s32 16, 16
      %19 = vsyncadd [#allocation5], %s18
      %22 = dma.hbm_to_smem %s0, 16, [#allocation2], [#allocation5]
    $region5: #{tpu_custom_call.1} parent=1 // pred_fallthru
      _
    // Predicated region
    $region6: #{tpu_custom_call.1} parent=1 // pred_check
      _
    $region7: #{tpu_custom_call.1} parent=1 // pred_check_branch
      %24 = sbr.rel (0) target = $region9
    $region8: #{tpu_custom_call.1} parent=1 // pred_region
      %s26 = ssub.s32 16, 16
      %27 = vsyncadd [#allocation6], %s26
      %s29 = sshll.u32 %s1, 4
      %s30 = int_to_ptr.vmem [resolvable:$true] %s29
      %32 = dma.vmem_to_smem %s30, 16, [#allocation7], [#allocation6]
    $region9: #{tpu_custom_call.1} parent=1 // pred_fallthru
      _
    // Predicated region
    $region10: #{tpu_custom_call.1} parent=1 // pred_check
      _
    $region11: #{tpu_custom_call.1} parent=1 // pred_check_branch
      %34 = sbr.rel (0) target = $region13
    $region12: #{tpu_custom_call.1} parent=1 // pred_region
      %s36 = ssub.s32 16, 16
      %37 = vsyncadd [#allocation9], %s36
      %s39 = sshll.u32 %s2, 4
      %s40 = int_to_ptr.vmem [resolvable:$true] %s39
      %42 = dma.vmem_to_smem %s40, 16, [#allocation8], [#allocation9]
    $region13: #{tpu_custom_call.1} parent=1 // pred_fallthru
      _
    // Predicated region
    $region14: #{tpu_custom_call.1} parent=1 // pred_check
      _
    $region15: #{tpu_custom_call.1} parent=1 // pred_check_branch
      %44 = sbr.rel (0) target = $region17
    $region16: #{tpu_custom_call.1} parent=1 // pred_region
      %s46 = ssub.s32 16, 16
      %47 = vsyncadd [#allocation9], %s46
      %s49 = sshll.u32 %s3, 4
      %s50 = int_to_ptr.vmem [resolvable:$true] %s49
      %52 = dma.vmem_to_smem %s50, 16, [#allocation10], [#allocation9]
    $region17: #{tpu_custom_call.1} parent=1 // pred_fallthru
      _
    // Predicated region
    $region18: #{tpu_custom_call.1} parent=1 // pred_check
      _
    $region19: #{tpu_custom_call.1} parent=1 // pred_check_branch
      %54 = sbr.rel (0) target = $region21
    $region20: #{tpu_custom_call.1} parent=1 // pred_region
      %s56 = ssub.s32 128, 128
      %57 = vsyncadd [#allocation3], %s56
      %s59 = sshll.u32 [#allocation11], 4
      %s60 = int_to_ptr.vmem [resolvable:$true] %s59
      %62 = dma.hbm_to_vmem [thread:$0]  %s4, 128, %s60, [#allocation3]
    $region21: #{tpu_custom_call.1} parent=1 // pred_fallthru
      _
    // Predicated region
    $region22: #{tpu_custom_call.1} parent=1 // pred_check
      _
    $region23: #{tpu_custom_call.1} parent=1 // pred_check_branch
      %64 = sbr.rel (0) target = $region25
    $region24: #{tpu_custom_call.1} parent=1 // pred_region
      %65 = dma.done [#allocation5], 16
    $region25: #{tpu_custom_call.1} parent=1 // pred_fallthru
      _
    // Predicated region
    $region26: #{tpu_custom_call.1} parent=1 // pred_check
      _
    $region27: #{tpu_custom_call.1} parent=1 // pred_check_branch
      %67 = sbr.rel (0) target = $region29
    $region28: #{tpu_custom_call.1} parent=1 // pred_region
      %68 = dma.done [#allocation6], 16
    $region29: #{tpu_custom_call.1} parent=1 // pred_fallthru
      _
    // Predicated region
    $region30: #{tpu_custom_call.1} parent=1 // pred_check
      _
    $region31: #{tpu_custom_call.1} parent=1 // pred_check_branch
      %70 = sbr.rel (0) target = $region33
    $region32: #{tpu_custom_call.1} parent=1 // pred_region
      %71 = dma.done [#allocation9], 16
    $region33: #{tpu_custom_call.1} parent=1 // pred_fallthru
      _
    // Predicated region
    $region34: #{tpu_custom_call.1} parent=1 // pred_check
      _
    $region35: #{tpu_custom_call.1} parent=1 // pred_check_branch
      %73 = sbr.rel (0) target = $region37
    $region36: #{tpu_custom_call.1} parent=1 // pred_region
      %74 = dma.done [#allocation9], 16
    $region37: #{tpu_custom_call.1} parent=1 // pred_fallthru
      _
    // Predicated region
    $region38: #{tpu_custom_call.1} parent=1 // pred_check
      _
    $region39: #{tpu_custom_call.1} parent=1 // pred_check_branch
      %76 = sbr.rel (0) target = $region41
    $region40: #{tpu_custom_call.1} parent=1 // pred_region
      %77 = dma.done [#allocation3], 128
    $region41: #{tpu_custom_call.1} parent=1 // pred_fallthru
      _
    %78 = sfence
    %v79 = vld [vmem:[#allocation11] sm:$0xff]
    %s80 = sld [smem:[#allocation2]]
    %v81 = vstv %s80
    %v82 = vmul.f32 %v79, %v81
    %s83 = sld [smem:[#allocation7]]
    %v84 = vstv %s83
    %v85 = vadd.f32 %v82, %v84
    %v86 = vxor.u32 %v85, 2147483648
    %v87 = vmul.f32 %v86, 1.442695
    %v88 = vpow.pop %v87
    %v89 = vadd.f32 %v88, 1.0
    %v90 = vrcp.pop %v89
    %v91 = vmul.f32 1.0, %v90
    %s92 = sld [smem:[#allocation2 + $0x1]]
    %v93 = vstv %s92
    %v94 = vmul.f32 %v79, %v93
    %s95 = sld [smem:[#allocation7 + $0x1]]
    %v96 = vstv %s95
    %v97 = vadd.f32 %v94, %v96
    %v98 = vxor.u32 %v97, 2147483648
    %v99 = vmul.f32 %v98, 1.442695
    %v100 = vpow.pop %v99
    %v101 = vadd.f32 %v100, 1.0
    %v102 = vrcp.pop %v101
    %v103 = vmul.f32 1.0, %v102
    %s104 = sld [smem:[#allocation2 + $0x2]]
    %v105 = vstv %s104
    %v106 = vmul.f32 %v79, %v105
    %s107 = sld [smem:[#allocation7 + $0x2]]
    %v108 = vstv %s107
    %v109 = vadd.f32 %v106, %v108
    %v110 = vxor.u32 %v109, 2147483648
    %v111 = vmul.f32 %v110, 1.442695
    %v112 = vpow.pop %v111
    %v113 = vadd.f32 %v112, 1.0
    %v114 = vrcp.pop %v113
    %v115 = vmul.f32 1.0, %v114
    %s116 = sld [smem:[#allocation8]]
    %v117 = vstv %s116
    %v118 = vmul.f32 %v91, %v117
    %s119 = sld [smem:[#allocation8 + $0x1]]
    %v120 = vstv %s119
    %v121 = vmul.f32 %v103, %v120
    %v122 = vadd.f32 %v118, %v121
    %s123 = sld [smem:[#allocation8 + $0x2]]
    %v124 = vstv %s123
    %v125 = vmul.f32 %v115, %v124
    %v126 = vadd.f32 %v122, %v125
    %s127 = sld [smem:[#allocation10]]
    %v128 = vstv %s127
    %v129 = vadd.f32 %v126, %v128
    %v130 = vxor.u32 %v129, 2147483648
    %v131 = vmul.f32 %v130, 1.442695
    %v132 = vpow.pop %v131
    %v133 = vadd.f32 %v132, 1.0
    %v134 = vrcp.pop %v133
    %v135 = vmul.f32 1.0, %v134
    %136 = vst [vmem:[#allocation12] sm:$0xff] %v135
    %s137 = sld [smem:[#allocation8 + $0x3]]
    %v138 = vstv %s137
    %v139 = vmul.f32 %v91, %v138
    %s140 = sld [smem:[#allocation8 + $0x4]]
    %v141 = vstv %s140
    %v142 = vmul.f32 %v103, %v141
    %v143 = vadd.f32 %v139, %v142
    %s144 = sld [smem:[#allocation8 + $0x5]]
    %v145 = vstv %s144
    %v146 = vmul.f32 %v115, %v145
    %v147 = vadd.f32 %v143, %v146
    %s148 = sld [smem:[#allocation10 + $0x1]]
    %v149 = vstv %s148
    %v150 = vadd.f32 %v147, %v149
    %v151 = vxor.u32 %v150, 2147483648
    %v152 = vmul.f32 %v151, 1.442695
    %v153 = vpow.pop %v152
    %v154 = vadd.f32 %v153, 1.0
    %v155 = vrcp.pop %v154
    %v156 = vmul.f32 1.0, %v155
    %s157 = scalar_lea.vmem [#allocation12], 8
    %158 = vst [vmem:[%s157] sm:$0xff] %v156
    %s159 = sld [smem:[#allocation8 + $0x6]]
    %v160 = vstv %s159
    %v161 = vmul.f32 %v91, %v160
    %s162 = sld [smem:[#allocation8 + $0x7]]
    %v163 = vstv %s162
    %v164 = vmul.f32 %v103, %v163
    %v165 = vadd.f32 %v161, %v164
    %s166 = sld [smem:[#allocation8 + $0x8]]
    %v167 = vstv %s166
    %v168 = vmul.f32 %v115, %v167
    %v169 = vadd.f32 %v165, %v168
    %s170 = sld [smem:[#allocation10 + $0x2]]
    %v171 = vstv %s170
    %v172 = vadd.f32 %v169, %v171
    %v173 = vxor.u32 %v172, 2147483648
    %v174 = vmul.f32 %v173, 1.442695
    %v175 = vpow.pop %v174
    %v176 = vadd.f32 %v175, 1.0
    %v177 = vrcp.pop %v176
    %v178 = vmul.f32 1.0, %v177
    %s179 = scalar_lea.vmem [#allocation12], 16
    %180 = vst [vmem:[%s179] sm:$0xff] %v178
    %s181 = sld [smem:[#allocation8 + $0x9]]
    %v182 = vstv %s181
    %v183 = vmul.f32 %v91, %v182
    %s184 = sld [smem:[#allocation8 + $0xa]]
    %v185 = vstv %s184
    %v186 = vmul.f32 %v103, %v185
    %v187 = vadd.f32 %v183, %v186
    %s188 = sld [smem:[#allocation8 + $0xb]]
    %v189 = vstv %s188
    %v190 = vmul.f32 %v115, %v189
    %v191 = vadd.f32 %v187, %v190
    %s192 = sld [smem:[#allocation10 + $0x3]]
    %v193 = vstv %s192
    %v194 = vadd.f32 %v191, %v193
    %v195 = vxor.u32 %v194, 2147483648
    %v196 = vmul.f32 %v195, 1.442695
    %v197 = vpow.pop %v196
    %v198 = vadd.f32 %v197, 1.0
    %v199 = vrcp.pop %v198
    %v200 = vmul.f32 1.0, %v199
    %s201 = scalar_lea.vmem [#allocation12], 24
    %202 = vst [vmem:[%s201] sm:$0xff] %v200
    // Predicated region
    $region42: #{tpu_custom_call.1} parent=1 // pred_check
      _
    $region43: #{tpu_custom_call.1} parent=1 // pred_check_branch
      %204 = sbr.rel (0) target = $region45
    $region44: #{tpu_custom_call.1} parent=1 // pred_region
      %s206 = ssub.s32 512, 512
      %207 = vsyncadd [#allocation4], %s206
      %s208 = sshll.u32 [#allocation12], 4
      %s209 = int_to_ptr.vmem [resolvable:$true] %s208
      %214 = dma.vmem_to_hbm [thread:$0]  %s209, 512, %s5, [#allocation4], 128, 128, 8
    $region45: #{tpu_custom_call.1} parent=1 // pred_fallthru
      _
    // Predicated region
    $region46: #{tpu_custom_call.1} parent=1 // pred_check
      _
    $region47: #{tpu_custom_call.1} parent=1 // pred_check_branch
      %216 = sbr.rel (0) target = $region49
    $region48: #{tpu_custom_call.1} parent=1 // pred_region
      %217 = dma.done [#allocation4], 512
    $region49: #{tpu_custom_call.1} parent=1 // pred_fallthru
      _
    %218 = vsyncpa [#allocation3], 1
    %219 = vsyncpa [#allocation4], 1
    %220 = vsyncpa [#allocation5], 1
    %221 = vsyncpa [#allocation6], 1
    %222 = vsyncpa [#allocation9], 1

</llo_original>
